<compile_context>
chip_gen: v7x
topology: tpu7x:2x2x1
jax: 0.10.0
libtpu: 0.0.40
codegen_flags: <defaults>
</compile_context>

<pallas_src>
import functools

import jax
import jax.numpy as jnp
from jax import lax
from jax.experimental import pallas as pl
from jax.experimental.pallas import tpu as pltpu

_SUBLANE = 8     # f32 sublane multiple
_LANE = 128      # lane width == packed gate block width


def _lstm_fc_kernel(x_ref, wih_ref, whh_ref, b_ref, wfc_ref, bfc_ref,
                    out_ref, xp_scr, *,
                    hidden, gate_pack, seq_len, batch_pad, input_size,
                    output_size):
    """Full LSTM recurrence + ReLU + Linear head in one kernel invocation.

    x_ref  : (T*BP, I)   time-major input, batch padded to a sublane multiple
    wih_ref: (I, GP)     input->gates weights, all gates packed in one lane block
    whh_ref: (H, GP)     hidden->gates weights (f32 or bf16), ~2 vregs total
    b_ref  : (1, GP)     b_ih + b_hh, packed like the gates
    wfc_ref: (1, H) if O==1 else (H, O)
    bfc_ref: (1, O)
    out_ref: (BP, O)
    xp_scr : (T, BP, GP) hoisted input projection; xp_scr[t] is whole (8,128) tiles
    """
    H, GP, T, BP, I, O = (hidden, gate_pack, seq_len, batch_pad, input_size,
                          output_size)

    # ---- Input projection, hoisted off the serial recurrence ----------------
    x2 = x_ref[...]                                        # (T*BP, I)
    if I < _SUBLANE:
        # A K=I(=1) matmul is pure MXU push/drain latency; use a VPU broadcast
        # MAC (outer product) over all timesteps instead.
        xp2 = jnp.broadcast_to(b_ref[...], (T * BP, GP))
        for ii in range(I):
            xp2 = xp2 + x2[:, ii:ii + 1] * wih_ref[ii:ii + 1, :]
    else:
        xp2 = jnp.dot(x2, wih_ref[...],
                      preferred_element_type=jnp.float32) + b_ref[...]
    # Free reshape: BP is a sublane multiple, so splitting (T*BP) -> (T, BP)
    # never crosses an (8,128) tile boundary.
    xp_scr[...] = xp2.reshape(T, BP, GP)

    # W_hh packed is only (H, GP): a couple of vregs, safe to pin across the
    # whole recurrence (the old (128, 512) layout made this hoist spill).
    whh = whh_ref[...]
    rec_dtype = whh.dtype

    def step(t, h, c):
        gates = xp_scr[t] + jnp.dot(h.astype(rec_dtype), whh,
                                    preferred_element_type=jnp.float32)
        # Fused nonlinearities: one sigmoid pass covers i, f and o; one tanh
        # for g. Gate order is the PyTorch order (i, f, g, o).
        sg = jax.nn.sigmoid(gates)
        i_g = sg[:, 0 * H:1 * H]
        f_g = sg[:, 1 * H:2 * H]
        o_g = sg[:, 3 * H:4 * H]
        g_g = jnp.tanh(gates[:, 2 * H:3 * H])
        c = f_g * c + i_g * g_g
        h = o_g * jnp.tanh(c)
        return h, c

    h = jnp.zeros((BP, H), jnp.float32)
    c = jnp.zeros((BP, H), jnp.float32)
    if T <= 16:
        for t in range(T):                       # toy T: full static unroll
            h, c = step(t, h, c)
    else:
        # Bounded unroll keeps vreg live ranges bounded while still letting
        # the scheduler overlap adjacent steps' EUP/MXU work.
        h, c = lax.fori_loop(0, T, lambda t, hc: step(t, *hc), (h, c),
                             unroll=8)

    # ---- fc = Sequential(ReLU, Linear) on h_T --------------------------------
    h_relu = jnp.maximum(h, 0.0)
    if O == 1:
        # N=1 matmul replaced by a VPU multiply + lane reduction.
        y = jnp.sum(h_relu * wfc_ref[...], axis=1, keepdims=True) + bfc_ref[...]
    else:
        y = jnp.dot(h_relu, wfc_ref[...],
                    preferred_element_type=jnp.float32) + bfc_ref[...]
    out_ref[...] = y.astype(out_ref.dtype)


def prepare_params(params, *, recurrent_dtype=jnp.float32):
    """One-time layout prep: transpose to right-multiply form and pack all four
    gates into a single 128-lane block (valid because 4*H <= 128)."""
    w_ih, w_hh = params["w_ih"], params["w_hh"]
    b_ih, b_hh = params["b_ih"], params["b_hh"]
    w_fc, b_fc = params["w_fc"], params["b_fc"]

    H = w_hh.shape[1]
    O = w_fc.shape[0]
    if 4 * H > _LANE:
        # TODO(synk): fall back to per-gate 128-lane strides when 4*H > 128.
        raise NotImplementedError("packed-gate layout requires 4*hidden <= 128")
    GP = _LANE

    def pack(w):        # (rows, 4H) -> (rows, GP); gates stay in i,f,g,o order
        return jnp.pad(w, ((0, 0), (0, GP - 4 * H)))

    wih = pack(jnp.transpose(w_ih).astype(jnp.float32))               # (I, GP)
    whh = pack(jnp.transpose(w_hh).astype(jnp.float32))               # (H, GP)
    whh = whh.astype(recurrent_dtype)
    b = pack((b_ih + b_hh).astype(jnp.float32).reshape(1, 4 * H))     # (1, GP)
    if O == 1:
        wfc = w_fc.astype(jnp.float32)                                # (1, H)
    else:
        wfc = jnp.transpose(w_fc).astype(jnp.float32)                 # (H, O)
    bfc = b_fc.astype(jnp.float32).reshape(1, O)                      # (1, O)
    return {"wih": wih, "whh": whh, "b": b, "wfc": wfc, "bfc": bfc}


def yahoo_lstm_forward(x, prep):
    """x: (B, T, I) batch-first, like the PyTorch module. Returns (B, O)."""
    B, T, I = x.shape
    wih, whh, bias = prep["wih"], prep["whh"], prep["b"]
    wfc, bfc = prep["wfc"], prep["bfc"]
    H, GP = whh.shape
    O = bfc.shape[1]
    BP = ((B + _SUBLANE - 1) // _SUBLANE) * _SUBLANE

    # Per-call data prep: batch-first -> time-major, batch padded to a sublane
    # multiple so every per-step tile inside the kernel is (8,128)-aligned.
    x_tm = jnp.transpose(x, (1, 0, 2)).astype(jnp.float32)            # (T, B, I)
    x_tm = jnp.pad(x_tm, ((0, 0), (0, BP - B), (0, 0)))               # (T, BP, I)
    x2d = x_tm.reshape(T * BP, I)

    kernel = functools.partial(
        _lstm_fc_kernel, hidden=H, gate_pack=GP, seq_len=T, batch_pad=BP,
        input_size=I, output_size=O)

    # VMEM budget from the actual resident buffers (+2x slack), capped at
    # 64 MiB so the same setting is legal on v7x's smaller physical VMEM.
    resident = (x2d.size * x2d.dtype.itemsize
                + T * BP * GP * 4
                + wih.size * 4 + whh.size * whh.dtype.itemsize
                + bias.size * 4 + wfc.size * 4 + bfc.size * 4
                + BP * O * 4)
    vmem_limit = int(min(64 * 2**20, max(16 * 2**20, 2 * resident)))

    vmem = pl.BlockSpec(memory_space=pltpu.MemorySpace.VMEM)
    out = pl.pallas_call(
        kernel,
        out_shape=jax.ShapeDtypeStruct((BP, O), jnp.float32),
        in_specs=[vmem] * 6,
        out_specs=vmem,
        scratch_shapes=[pltpu.VMEM((T, BP, GP), jnp.float32)],
        compiler_params=pltpu.CompilerParams(vmem_limit_bytes=vmem_limit),
    )(x2d, wih, whh, bias, wfc, bfc)
    return out[:B]


def _reference_forward(x, params):
    """Pure-JAX reference matching torch.nn.LSTM + ReLU + Linear semantics."""
    w_ih, w_hh, b_ih, b_hh, w_fc, b_fc = (
        params["w_ih"], params["w_hh"], params["b_ih"], params["b_hh"],
        params["w_fc"], params["b_fc"])
    B, T, I = x.shape
    H = w_hh.shape[1]
    h = jnp.zeros((B, H), jnp.float32)
    c = jnp.zeros((B, H), jnp.float32)
    for t in range(T):
        gates = x[:, t, :] @ w_ih.T + b_ih + h @ w_hh.T + b_hh
        i = jax.nn.sigmoid(gates[:, 0 * H:1 * H])
        f = jax.nn.sigmoid(gates[:, 1 * H:2 * H])
        g = jnp.tanh(gates[:, 2 * H:3 * H])
        o = jax.nn.sigmoid(gates[:, 3 * H:4 * H])
        c = f * c + i * g
        h = o * jnp.tanh(c)
    return jnp.maximum(h, 0.0) @ w_fc.T + b_fc


def init_params(key, input_size, hidden_size, output_size):
    """Deterministic synthetic params with PyTorch-default uniform init."""
    ks = jax.random.split(key, 6)
    k_lstm = 1.0 / jnp.sqrt(hidden_size)
    k_fc = 1.0 / jnp.sqrt(hidden_size)
    u = lambda k, shape, s: jax.random.uniform(k, shape, jnp.float32, -s, s)
    return {
        "w_ih": u(ks[0], (4 * hidden_size, input_size), k_lstm),
        "w_hh": u(ks[1], (4 * hidden_size, hidden_size), k_lstm),
        "b_ih": u(ks[2], (4 * hidden_size,), k_lstm),
        "b_hh": u(ks[3], (4 * hidden_size,), k_lstm),
        "w_fc": u(ks[4], (output_size, hidden_size), k_fc),
        "b_fc": u(ks[5], (output_size,), k_fc),
    }


if __name__ == "__main__":
    input_size, hidden_size, num_layers, output_size = 1, 10, 1, 1
    batch, seq_len = 4, 8

    key = jax.random.PRNGKey(0)
    k_x, k_p = jax.random.split(key)
    x = jax.random.normal(k_x, (batch, seq_len, input_size), jnp.float32)
    params = init_params(k_p, input_size, hidden_size, output_size)
    ref = _reference_forward(x, params)

    fwd = jax.jit(yahoo_lstm_forward)

    # Default f32 recurrence: matches the f32 reference tightly.
    prep = prepare_params(params)
    out = jax.block_until_ready(fwd(x, prep))
    assert out.shape == (batch, output_size)
    assert jnp.allclose(out, ref, atol=1e-5, rtol=1e-5), (out, ref)

    # bf16 recurrent-matmul fast path (bf16-native MXU on v5e/v6e/v7x); all
    # elementwise gate math and accumulation stay f32. NOTE: re-validate the
    # tolerance at production H/T — bf16 error compounds through the recurrence.
    prep_bf16 = prepare_params(params, recurrent_dtype=jnp.bfloat16)
    out_bf16 = jax.block_until_ready(fwd(x, prep_bf16))
    assert jnp.allclose(out_bf16, ref, atol=1e-1, rtol=1e-1), (out_bf16, ref)

    print("KERNEL_OK")
</pallas_src>

<mosaic_0001>
module attributes {stable_mosaic.version = 11 : i64} {
  func.func @_lstm_fc_kernel(%arg0: memref<64x1xf32, #tpu.memory_space<vmem>>, %arg1: memref<1x128xf32, #tpu.memory_space<vmem>>, %arg2: memref<10x128xf32, #tpu.memory_space<vmem>>, %arg3: memref<1x128xf32, #tpu.memory_space<vmem>>, %arg4: memref<1x10xf32, #tpu.memory_space<vmem>>, %arg5: memref<1x1xf32, #tpu.memory_space<vmem>>, %arg6: memref<8x1xf32, #tpu.memory_space<vmem>>, %arg7: memref<8x8x128xf32, #tpu.memory_space<vmem>>) attributes {dimension_semantics = [], scalar_prefetch = 0 : i64, scratch_operands = 1 : i64, tpu.core_type = #tpu.core_type<tc>} {
    %c0 = arith.constant 0 : index
    %c0_0 = arith.constant 0 : index
    %0 = vector.load %arg0[%c0, %c0_0] : memref<64x1xf32, #tpu.memory_space<vmem>>, vector<64x1xf32>
    %c0_1 = arith.constant 0 : index
    %c0_2 = arith.constant 0 : index
    %1 = vector.load %arg3[%c0_1, %c0_2] : memref<1x128xf32, #tpu.memory_space<vmem>>, vector<1x128xf32>
    %2 = vector.shape_cast %1 : vector<1x128xf32> to vector<1x128xf32>
    %3 = vector.broadcast %2 : vector<1x128xf32> to vector<64x128xf32>
    %c0_3 = arith.constant 0 : index
    %c0_4 = arith.constant 0 : index
    %4 = vector.load %arg1[%c0_3, %c0_4] : memref<1x128xf32, #tpu.memory_space<vmem>>, vector<1x128xf32>
    %5 = vector.broadcast %0 : vector<64x1xf32> to vector<64x128xf32>
    %6 = vector.broadcast %4 : vector<1x128xf32> to vector<64x128xf32>
    %7 = arith.mulf %5, %6 : vector<64x128xf32>
    %8 = arith.addf %3, %7 : vector<64x128xf32>
    %9 = vector.shape_cast %8 : vector<64x128xf32> to vector<8x8x128xf32>
    %c0_5 = arith.constant 0 : index
    %c0_6 = arith.constant 0 : index
    %c0_7 = arith.constant 0 : index
    %10 = vector.load %arg7[%c0_5, %c0_6, %c0_7] : memref<8x8x128xf32, #tpu.memory_space<vmem>>, vector<8x8x128xf32>
    tpu.vector_store %arg7[%c0_5, %c0_6, %c0_7], %9 {strides = array<i32>} : memref<8x8x128xf32, #tpu.memory_space<vmem>>, vector<8x8x128xf32>,
    %c0_8 = arith.constant 0 : index
    %c0_9 = arith.constant 0 : index
    %11 = vector.load %arg2[%c0_8, %c0_9] : memref<10x128xf32, #tpu.memory_space<vmem>>, vector<10x128xf32>
    %cst = arith.constant 0.000000e+00 : f32
    %12 = vector.broadcast %cst : f32 to vector<8x10xf32>
    %cst_10 = arith.constant 0.000000e+00 : f32
    %13 = vector.broadcast %cst_10 : f32 to vector<8x10xf32>
    %c0_11 = arith.constant 0 : index
    %c0_12 = arith.constant 0 : index
    %c0_13 = arith.constant 0 : index
    %14 = vector.load %arg7[%c0_11, %c0_12, %c0_13] : memref<8x8x128xf32, #tpu.memory_space<vmem>>, vector<1x8x128xf32>
    %15 = vector.shape_cast %14 : vector<1x8x128xf32> to vector<8x128xf32>
    %cst_14 = arith.constant dense<0.000000e+00> : vector<8x128xf32>
    %16 = tpu.matmul %12, %11, %cst_14 {dimension_numbers = #tpu.dot_dimension_numbers<[1], [0], [0], [1], [0, 0, 1, 1], [], []>} : vector<8x10xf32>, vector<10x128xf32>, vector<8x128xf32> -> vector<8x128xf32>
    %17 = arith.addf %15, %16 : vector<8x128xf32>
    %18 = arith.negf %17 : vector<8x128xf32>
    %19 = math.exp %18 : vector<8x128xf32>
    %cst_15 = arith.constant 1.000000e+00 : f32
    %20 = vector.broadcast %cst_15 : f32 to vector<8x128xf32>
    %21 = arith.addf %20, %19 : vector<8x128xf32>
    %22 = arith.divf %20, %21 : vector<8x128xf32>
    %23 = vector.extract_strided_slice %22 {offsets = [0, 0], sizes = [8, 10], strides = [1, 1]} : vector<8x128xf32> to vector<8x10xf32>
    %24 = vector.extract_strided_slice %22 {offsets = [0, 10], sizes = [8, 10], strides = [1, 1]} : vector<8x128xf32> to vector<8x10xf32>
    %25 = vector.extract_strided_slice %22 {offsets = [0, 30], sizes = [8, 10], strides = [1, 1]} : vector<8x128xf32> to vector<8x10xf32>
    %26 = vector.extract_strided_slice %17 {offsets = [0, 20], sizes = [8, 10], strides = [1, 1]} : vector<8x128xf32> to vector<8x10xf32>
    %27 = math.tanh %26 : vector<8x10xf32>
    %28 = arith.mulf %24, %13 : vector<8x10xf32>
    %29 = arith.mulf %23, %27 : vector<8x10xf32>
    %30 = arith.addf %28, %29 : vector<8x10xf32>
    %31 = math.tanh %30 : vector<8x10xf32>
    %32 = arith.mulf %25, %31 : vector<8x10xf32>
    %c1 = arith.constant 1 : index
    %c0_16 = arith.constant 0 : index
    %c0_17 = arith.constant 0 : index
    %33 = vector.load %arg7[%c1, %c0_16, %c0_17] : memref<8x8x128xf32, #tpu.memory_space<vmem>>, vector<1x8x128xf32>
    %34 = vector.shape_cast %33 : vector<1x8x128xf32> to vector<8x128xf32>
    %cst_18 = arith.constant dense<0.000000e+00> : vector<8x128xf32>
    %35 = tpu.matmul %32, %11, %cst_18 {dimension_numbers = #tpu.dot_dimension_numbers<[1], [0], [0], [1], [0, 0, 1, 1], [], []>} : vector<8x10xf32>, vector<10x128xf32>, vector<8x128xf32> -> vector<8x128xf32>
    %36 = arith.addf %34, %35 : vector<8x128xf32>
    %37 = arith.negf %36 : vector<8x128xf32>
    %38 = math.exp %37 : vector<8x128xf32>
    %cst_19 = arith.constant 1.000000e+00 : f32
    %39 = vector.broadcast %cst_19 : f32 to vector<8x128xf32>
    %40 = arith.addf %39, %38 : vector<8x128xf32>
    %41 = arith.divf %39, %40 : vector<8x128xf32>
    %42 = vector.extract_strided_slice %41 {offsets = [0, 0], sizes = [8, 10], strides = [1, 1]} : vector<8x128xf32> to vector<8x10xf32>
    %43 = vector.extract_strided_slice %41 {offsets = [0, 10], sizes = [8, 10], strides = [1, 1]} : vector<8x128xf32> to vector<8x10xf32>
    %44 = vector.extract_strided_slice %41 {offsets = [0, 30], sizes = [8, 10], strides = [1, 1]} : vector<8x128xf32> to vector<8x10xf32>
    %45 = vector.extract_strided_slice %36 {offsets = [0, 20], sizes = [8, 10], strides = [1, 1]} : vector<8x128xf32> to vector<8x10xf32>
    %46 = math.tanh %45 : vector<8x10xf32>
    %47 = arith.mulf %43, %30 : vector<8x10xf32>
    %48 = arith.mulf %42, %46 : vector<8x10xf32>
    %49 = arith.addf %47, %48 : vector<8x10xf32>
    %50 = math.tanh %49 : vector<8x10xf32>
    %51 = arith.mulf %44, %50 : vector<8x10xf32>
    %c2 = arith.constant 2 : index
    %c0_20 = arith.constant 0 : index
    %c0_21 = arith.constant 0 : index
    %52 = vector.load %arg7[%c2, %c0_20, %c0_21] : memref<8x8x128xf32, #tpu.memory_space<vmem>>, vector<1x8x128xf32>
    %53 = vector.shape_cast %52 : vector<1x8x128xf32> to vector<8x128xf32>
    %cst_22 = arith.constant dense<0.000000e+00> : vector<8x128xf32>
    %54 = tpu.matmul %51, %11, %cst_22 {dimension_numbers = #tpu.dot_dimension_numbers<[1], [0], [0], [1], [0, 0, 1, 1], [], []>} : vector<8x10xf32>, vector<10x128xf32>, vector<8x128xf32> -> vector<8x128xf32>
    %55 = arith.addf %53, %54 : vector<8x128xf32>
    %56 = arith.negf %55 : vector<8x128xf32>
    %57 = math.exp %56 : vector<8x128xf32>
    %cst_23 = arith.constant 1.000000e+00 : f32
    %58 = vector.broadcast %cst_23 : f32 to vector<8x128xf32>
    %59 = arith.addf %58, %57 : vector<8x128xf32>
    %60 = arith.divf %58, %59 : vector<8x128xf32>
    %61 = vector.extract_strided_slice %60 {offsets = [0, 0], sizes = [8, 10], strides = [1, 1]} : vector<8x128xf32> to vector<8x10xf32>
    %62 = vector.extract_strided_slice %60 {offsets = [0, 10], sizes = [8, 10], strides = [1, 1]} : vector<8x128xf32> to vector<8x10xf32>
    %63 = vector.extract_strided_slice %60 {offsets = [0, 30], sizes = [8, 10], strides = [1, 1]} : vector<8x128xf32> to vector<8x10xf32>
    %64 = vector.extract_strided_slice %55 {offsets = [0, 20], sizes = [8, 10], strides = [1, 1]} : vector<8x128xf32> to vector<8x10xf32>
    %65 = math.tanh %64 : vector<8x10xf32>
    %66 = arith.mulf %62, %49 : vector<8x10xf32>
    %67 = arith.mulf %61, %65 : vector<8x10xf32>
    %68 = arith.addf %66, %67 : vector<8x10xf32>
    %69 = math.tanh %68 : vector<8x10xf32>
    %70 = arith.mulf %63, %69 : vector<8x10xf32>
    %c3 = arith.constant 3 : index
    %c0_24 = arith.constant 0 : index
    %c0_25 = arith.constant 0 : index
    %71 = vector.load %arg7[%c3, %c0_24, %c0_25] : memref<8x8x128xf32, #tpu.memory_space<vmem>>, vector<1x8x128xf32>
    %72 = vector.shape_cast %71 : vector<1x8x128xf32> to vector<8x128xf32>
    %cst_26 = arith.constant dense<0.000000e+00> : vector<8x128xf32>
    %73 = tpu.matmul %70, %11, %cst_26 {dimension_numbers = #tpu.dot_dimension_numbers<[1], [0], [0], [1], [0, 0, 1, 1], [], []>} : vector<8x10xf32>, vector<10x128xf32>, vector<8x128xf32> -> vector<8x128xf32>
    %74 = arith.addf %72, %73 : vector<8x128xf32>
    %75 = arith.negf %74 : vector<8x128xf32>
    %76 = math.exp %75 : vector<8x128xf32>
    %cst_27 = arith.constant 1.000000e+00 : f32
    %77 = vector.broadcast %cst_27 : f32 to vector<8x128xf32>
    %78 = arith.addf %77, %76 : vector<8x128xf32>
    %79 = arith.divf %77, %78 : vector<8x128xf32>
    %80 = vector.extract_strided_slice %79 {offsets = [0, 0], sizes = [8, 10], strides = [1, 1]} : vector<8x128xf32> to vector<8x10xf32>
    %81 = vector.extract_strided_slice %79 {offsets = [0, 10], sizes = [8, 10], strides = [1, 1]} : vector<8x128xf32> to vector<8x10xf32>
    %82 = vector.extract_strided_slice %79 {offsets = [0, 30], sizes = [8, 10], strides = [1, 1]} : vector<8x128xf32> to vector<8x10xf32>
    %83 = vector.extract_strided_slice %74 {offsets = [0, 20], sizes = [8, 10], strides = [1, 1]} : vector<8x128xf32> to vector<8x10xf32>
    %84 = math.tanh %83 : vector<8x10xf32>
    %85 = arith.mulf %81, %68 : vector<8x10xf32>
    %86 = arith.mulf %80, %84 : vector<8x10xf32>
    %87 = arith.addf %85, %86 : vector<8x10xf32>
    %88 = math.tanh %87 : vector<8x10xf32>
    %89 = arith.mulf %82, %88 : vector<8x10xf32>
    %c4 = arith.constant 4 : index
    %c0_28 = arith.constant 0 : index
    %c0_29 = arith.constant 0 : index
    %90 = vector.load %arg7[%c4, %c0_28, %c0_29] : memref<8x8x128xf32, #tpu.memory_space<vmem>>, vector<1x8x128xf32>
    %91 = vector.shape_cast %90 : vector<1x8x128xf32> to vector<8x128xf32>
    %cst_30 = arith.constant dense<0.000000e+00> : vector<8x128xf32>
    %92 = tpu.matmul %89, %11, %cst_30 {dimension_numbers = #tpu.dot_dimension_numbers<[1], [0], [0], [1], [0, 0, 1, 1], [], []>} : vector<8x10xf32>, vector<10x128xf32>, vector<8x128xf32> -> vector<8x128xf32>
    %93 = arith.addf %91, %92 : vector<8x128xf32>
    %94 = arith.negf %93 : vector<8x128xf32>
    %95 = math.exp %94 : vector<8x128xf32>
    %cst_31 = arith.constant 1.000000e+00 : f32
    %96 = vector.broadcast %cst_31 : f32 to vector<8x128xf32>
    %97 = arith.addf %96, %95 : vector<8x128xf32>
    %98 = arith.divf %96, %97 : vector<8x128xf32>
    %99 = vector.extract_strided_slice %98 {offsets = [0, 0], sizes = [8, 10], strides = [1, 1]} : vector<8x128xf32> to vector<8x10xf32>
    %100 = vector.extract_strided_slice %98 {offsets = [0, 10], sizes = [8, 10], strides = [1, 1]} : vector<8x128xf32> to vector<8x10xf32>
    %101 = vector.extract_strided_slice %98 {offsets = [0, 30], sizes = [8, 10], strides = [1, 1]} : vector<8x128xf32> to vector<8x10xf32>
    %102 = vector.extract_strided_slice %93 {offsets = [0, 20], sizes = [8, 10], strides = [1, 1]} : vector<8x128xf32> to vector<8x10xf32>
    %103 = math.tanh %102 : vector<8x10xf32>
    %104 = arith.mulf %100, %87 : vector<8x10xf32>
    %105 = arith.mulf %99, %103 : vector<8x10xf32>
    %106 = arith.addf %104, %105 : vector<8x10xf32>
    %107 = math.tanh %106 : vector<8x10xf32>
    %108 = arith.mulf %101, %107 : vector<8x10xf32>
    %c5 = arith.constant 5 : index
    %c0_32 = arith.constant 0 : index
    %c0_33 = arith.constant 0 : index
    %109 = vector.load %arg7[%c5, %c0_32, %c0_33] : memref<8x8x128xf32, #tpu.memory_space<vmem>>, vector<1x8x128xf32>
    %110 = vector.shape_cast %109 : vector<1x8x128xf32> to vector<8x128xf32>
    %cst_34 = arith.constant dense<0.000000e+00> : vector<8x128xf32>
    %111 = tpu.matmul %108, %11, %cst_34 {dimension_numbers = #tpu.dot_dimension_numbers<[1], [0], [0], [1], [0, 0, 1, 1], [], []>} : vector<8x10xf32>, vector<10x128xf32>, vector<8x128xf32> -> vector<8x128xf32>
    %112 = arith.addf %110, %111 : vector<8x128xf32>
    %113 = arith.negf %112 : vector<8x128xf32>
    %114 = math.exp %113 : vector<8x128xf32>
    %cst_35 = arith.constant 1.000000e+00 : f32
    %115 = vector.broadcast %cst_35 : f32 to vector<8x128xf32>
    %116 = arith.addf %115, %114 : vector<8x128xf32>
    %117 = arith.divf %115, %116 : vector<8x128xf32>
    %118 = vector.extract_strided_slice %117 {offsets = [0, 0], sizes = [8, 10], strides = [1, 1]} : vector<8x128xf32> to vector<8x10xf32>
    %119 = vector.extract_strided_slice %117 {offsets = [0, 10], sizes = [8, 10], strides = [1, 1]} : vector<8x128xf32> to vector<8x10xf32>
    %120 = vector.extract_strided_slice %117 {offsets = [0, 30], sizes = [8, 10], strides = [1, 1]} : vector<8x128xf32> to vector<8x10xf32>
    %121 = vector.extract_strided_slice %112 {offsets = [0, 20], sizes = [8, 10], strides = [1, 1]} : vector<8x128xf32> to vector<8x10xf32>
    %122 = math.tanh %121 : vector<8x10xf32>
    %123 = arith.mulf %119, %106 : vector<8x10xf32>
    %124 = arith.mulf %118, %122 : vector<8x10xf32>
    %125 = arith.addf %123, %124 : vector<8x10xf32>
    %126 = math.tanh %125 : vector<8x10xf32>
    %127 = arith.mulf %120, %126 : vector<8x10xf32>
    %c6 = arith.constant 6 : index
    %c0_36 = arith.constant 0 : index
    %c0_37 = arith.constant 0 : index
    %128 = vector.load %arg7[%c6, %c0_36, %c0_37] : memref<8x8x128xf32, #tpu.memory_space<vmem>>, vector<1x8x128xf32>
    %129 = vector.shape_cast %128 : vector<1x8x128xf32> to vector<8x128xf32>
    %cst_38 = arith.constant dense<0.000000e+00> : vector<8x128xf32>
    %130 = tpu.matmul %127, %11, %cst_38 {dimension_numbers = #tpu.dot_dimension_numbers<[1], [0], [0], [1], [0, 0, 1, 1], [], []>} : vector<8x10xf32>, vector<10x128xf32>, vector<8x128xf32> -> vector<8x128xf32>
    %131 = arith.addf %129, %130 : vector<8x128xf32>
    %132 = arith.negf %131 : vector<8x128xf32>
    %133 = math.exp %132 : vector<8x128xf32>
    %cst_39 = arith.constant 1.000000e+00 : f32
    %134 = vector.broadcast %cst_39 : f32 to vector<8x128xf32>
    %135 = arith.addf %134, %133 : vector<8x128xf32>
    %136 = arith.divf %134, %135 : vector<8x128xf32>
    %137 = vector.extract_strided_slice %136 {offsets = [0, 0], sizes = [8, 10], strides = [1, 1]} : vector<8x128xf32> to vector<8x10xf32>
    %138 = vector.extract_strided_slice %136 {offsets = [0, 10], sizes = [8, 10], strides = [1, 1]} : vector<8x128xf32> to vector<8x10xf32>
    %139 = vector.extract_strided_slice %136 {offsets = [0, 30], sizes = [8, 10], strides = [1, 1]} : vector<8x128xf32> to vector<8x10xf32>
    %140 = vector.extract_strided_slice %131 {offsets = [0, 20], sizes = [8, 10], strides = [1, 1]} : vector<8x128xf32> to vector<8x10xf32>
    %141 = math.tanh %140 : vector<8x10xf32>
    %142 = arith.mulf %138, %125 : vector<8x10xf32>
    %143 = arith.mulf %137, %141 : vector<8x10xf32>
    %144 = arith.addf %142, %143 : vector<8x10xf32>
    %145 = math.tanh %144 : vector<8x10xf32>
    %146 = arith.mulf %139, %145 : vector<8x10xf32>
    %c7 = arith.constant 7 : index
    %c0_40 = arith.constant 0 : index
    %c0_41 = arith.constant 0 : index
    %147 = vector.load %arg7[%c7, %c0_40, %c0_41] : memref<8x8x128xf32, #tpu.memory_space<vmem>>, vector<1x8x128xf32>
    %148 = vector.shape_cast %147 : vector<1x8x128xf32> to vector<8x128xf32>
    %cst_42 = arith.constant dense<0.000000e+00> : vector<8x128xf32>
    %149 = tpu.matmul %146, %11, %cst_42 {dimension_numbers = #tpu.dot_dimension_numbers<[1], [0], [0], [1], [0, 0, 1, 1], [], []>} : vector<8x10xf32>, vector<10x128xf32>, vector<8x128xf32> -> vector<8x128xf32>
    %150 = arith.addf %148, %149 : vector<8x128xf32>
    %151 = arith.negf %150 : vector<8x128xf32>
    %152 = math.exp %151 : vector<8x128xf32>
    %cst_43 = arith.constant 1.000000e+00 : f32
    %153 = vector.broadcast %cst_43 : f32 to vector<8x128xf32>
    %154 = arith.addf %153, %152 : vector<8x128xf32>
    %155 = arith.divf %153, %154 : vector<8x128xf32>
    %156 = vector.extract_strided_slice %155 {offsets = [0, 0], sizes = [8, 10], strides = [1, 1]} : vector<8x128xf32> to vector<8x10xf32>
    %157 = vector.extract_strided_slice %155 {offsets = [0, 10], sizes = [8, 10], strides = [1, 1]} : vector<8x128xf32> to vector<8x10xf32>
    %158 = vector.extract_strided_slice %155 {offsets = [0, 30], sizes = [8, 10], strides = [1, 1]} : vector<8x128xf32> to vector<8x10xf32>
    %159 = vector.extract_strided_slice %150 {offsets = [0, 20], sizes = [8, 10], strides = [1, 1]} : vector<8x128xf32> to vector<8x10xf32>
    %160 = math.tanh %159 : vector<8x10xf32>
    %161 = arith.mulf %157, %144 : vector<8x10xf32>
    %162 = arith.mulf %156, %160 : vector<8x10xf32>
    %163 = arith.addf %161, %162 : vector<8x10xf32>
    %164 = math.tanh %163 : vector<8x10xf32>
    %165 = arith.mulf %158, %164 : vector<8x10xf32>
    %cst_44 = arith.constant 0.000000e+00 : f32
    %166 = vector.broadcast %cst_44 : f32 to vector<8x10xf32>
    %167 = arith.maximumf %165, %166 : vector<8x10xf32>
    %c0_45 = arith.constant 0 : index
    %c0_46 = arith.constant 0 : index
    %168 = vector.load %arg4[%c0_45, %c0_46] : memref<1x10xf32, #tpu.memory_space<vmem>>, vector<1x10xf32>
    %169 = vector.broadcast %168 : vector<1x10xf32> to vector<8x10xf32>
    %170 = arith.mulf %167, %169 : vector<8x10xf32>
    %cst_47 = arith.constant dense<0.000000e+00> : vector<8xf32>
    %171 = vector.multi_reduction <add>, %170, %cst_47 [1] : vector<8x10xf32> to vector<8xf32>
    %172 = vector.shape_cast %171 : vector<8xf32> to vector<8x1xf32>
    %c0_48 = arith.constant 0 : index
    %c0_49 = arith.constant 0 : index
    %173 = vector.load %arg5[%c0_48, %c0_49] : memref<1x1xf32, #tpu.memory_space<vmem>>, vector<1x1xf32>
    %174 = vector.broadcast %173 : vector<1x1xf32> to vector<8x1xf32>
    %175 = arith.addf %172, %174 : vector<8x1xf32>
    %c0_50 = arith.constant 0 : index
    %c0_51 = arith.constant 0 : index
    %176 = vector.load %arg6[%c0_50, %c0_51] : memref<8x1xf32, #tpu.memory_space<vmem>>, vector<8x1xf32>
    tpu.vector_store %arg6[%c0_50, %c0_51], %175 {strides = array<i32>} : memref<8x1xf32, #tpu.memory_space<vmem>>, vector<8x1xf32>,
    return
  }
}

</mosaic_0001>

<llo_original>
// kernel: yahoo_lstm_forward.1
$region0: #{yahoo_lstm_forward.1}
  #allocation0 [shape = 'u32[]', space=smem, size = 0x4, offset = 0x4, fixed_abs, tag = 'smem constant byte address 0x4 - core index']
  #allocation1 [shape = 'u32[144,128]{1,0:T(1,128)}', space=vmem, size = 0x12000, scoped, tag = 'internal scratch']
  #allocation2 [shape = 'f32[8,8,128]{2,1,0:T(8,128)}', space=vmem, size = 0x8000, scoped, tag = 'scratch operand']
  #allocation3 [shape = 'f32[1,1]{1,0:T(1,128)S(1)}', space=vmem, size = 0x200, scoped, tag = 'scoped memory for yahoo_lstm_forward.1']
  %s0 = inlined_call_operand.vmem [shape: f32[64,1], index: 0, kind: input, shape index: {}]
  %s1 = inlined_call_operand.vmem [shape: f32[1,128], index: 1, kind: input, shape index: {}]
  %s2 = inlined_call_operand.vmem [shape: f32[10,128], index: 2, kind: input, shape index: {}]
  %s3 = inlined_call_operand.vmem [shape: f32[1,128], index: 3, kind: input, shape index: {}]
  %s4 = inlined_call_operand.vmem [shape: f32[1,10], index: 4, kind: input, shape index: {}]
  %s5 = inlined_call_operand.<no memory space> [shape: f32[1,1], index: 5, kind: input, shape index: {}]
  %s6 = inlined_call_operand.vmem [shape: f32[8,1], index: 6, kind: output, shape index: {}]
  %s7 = sld [smem:[#allocation0]]
  $region34: #{yahoo_lstm_forward.1} parent=0
    _
  %s9 = ssub.s32 1, %s7
  %s10 = scalar_select 0, %s9, %s7
  %v11 = vstv %s5
  %12 = vst [vmem:[#allocation3] sm:$0x1] %v11
  // Predicated region
  $region2: #{yahoo_lstm_forward.1} parent=0 // pred_check
    _
  $region3: #{yahoo_lstm_forward.1} parent=0 // pred_check_branch
    %14 = sbr.rel (0) target = $region5
  $region4: #{yahoo_lstm_forward.1} parent=0 // pred_region
    _
  $region5: #{yahoo_lstm_forward.1} parent=0 // pred_fallthru
    _
  // Predicated region
  $region6: #{yahoo_lstm_forward.1} parent=0 // pred_check
    _
  $region7: #{yahoo_lstm_forward.1} parent=0 // pred_check_branch
    %16 = sbr.rel (0) target = $region9
  $region8: #{yahoo_lstm_forward.1} parent=0 // pred_region
    _
  $region9: #{yahoo_lstm_forward.1} parent=0 // pred_fallthru
    _
  // Predicated region
  $region10: #{yahoo_lstm_forward.1} parent=0 // pred_check
    _
  $region11: #{yahoo_lstm_forward.1} parent=0 // pred_check_branch
    %18 = sbr.rel (0) target = $region13
  $region12: #{yahoo_lstm_forward.1} parent=0 // pred_region
    _
  $region13: #{yahoo_lstm_forward.1} parent=0 // pred_fallthru
    _
  // Predicated region
  $region14: #{yahoo_lstm_forward.1} parent=0 // pred_check
    _
  $region15: #{yahoo_lstm_forward.1} parent=0 // pred_check_branch
    %20 = sbr.rel (0) target = $region17
  $region16: #{yahoo_lstm_forward.1} parent=0 // pred_region
    _
  $region17: #{yahoo_lstm_forward.1} parent=0 // pred_fallthru
    _
  // Predicated region
  $region18: #{yahoo_lstm_forward.1} parent=0 // pred_check
    _
  $region19: #{yahoo_lstm_forward.1} parent=0 // pred_check_branch
    %22 = sbr.rel (0) target = $region21
  $region20: #{yahoo_lstm_forward.1} parent=0 // pred_region
    _
  $region21: #{yahoo_lstm_forward.1} parent=0 // pred_fallthru
    _
  // Predicated region
  $region22: #{yahoo_lstm_forward.1} parent=0 // pred_check
    _
  $region23: #{yahoo_lstm_forward.1} parent=0 // pred_check_branch
    %24 = sbr.rel (0) target = $region25
  $region24: #{yahoo_lstm_forward.1} parent=0 // pred_region
    _
  $region25: #{yahoo_lstm_forward.1} parent=0 // pred_fallthru
    _
  %v25 = vld [vmem:[%s0] sm:$0xff]
  %v26 = vld [vmem:[%s0 + $0x8] sm:$0xff]
  %v27 = vld [vmem:[%s0 + $0x10] sm:$0xff]
  %v28 = vld [vmem:[%s0 + $0x18] sm:$0xff]
  %v29 = vld [vmem:[%s0 + $0x20] sm:$0xff]
  %v30 = vld [vmem:[%s0 + $0x28] sm:$0xff]
  %v31 = vld [vmem:[%s0 + $0x30] sm:$0xff]
  %v32 = vld [vmem:[%s0 + $0x38] sm:$0xff]
  %v33 = vld [vmem:[%s3] sm:$0x1]
  %v35 = vlaneseq
  %v36 = vshrl.u32 %v35, 7
  %v37 = vsub.s32 0, %v36
  %v38 = vrot.slane %v33, %v37
  %v40 = vld [vmem:[%s1] sm:$0x1]
  %42 = vset.pattern.permute.xlu0 0
  %43 = vperm.xlu0 %42, %v25
  %v44 = vpop.permute.xlu0 %43
  %47 = vset.pattern.permute.xlu0 0
  %48 = vperm.xlu0 %47, %v26
  %v49 = vpop.permute.xlu0 %48
  %52 = vset.pattern.permute.xlu0 0
  %53 = vperm.xlu0 %52, %v27
  %v54 = vpop.permute.xlu0 %53
  %57 = vset.pattern.permute.xlu0 0
  %58 = vperm.xlu0 %57, %v28
  %v59 = vpop.permute.xlu0 %58
  %62 = vset.pattern.permute.xlu0 0
  %63 = vperm.xlu0 %62, %v29
  %v64 = vpop.permute.xlu0 %63
  %67 = vset.pattern.permute.xlu0 0
  %68 = vperm.xlu0 %67, %v30
  %v69 = vpop.permute.xlu0 %68
  %72 = vset.pattern.permute.xlu0 0
  %73 = vperm.xlu0 %72, %v31
  %v74 = vpop.permute.xlu0 %73
  %77 = vset.pattern.permute.xlu0 0
  %78 = vperm.xlu0 %77, %v32
  %v79 = vpop.permute.xlu0 %78
  %v82 = vlaneseq
  %v83 = vshrl.u32 %v82, 7
  %v84 = vsub.s32 0, %v83
  %v85 = vrot.slane %v40, %v84
  %v87 = vmul.f32 %v44, %v85
  %v88 = vmul.f32 %v49, %v85
  %v89 = vmul.f32 %v54, %v85
  %v90 = vmul.f32 %v59, %v85
  %v91 = vmul.f32 %v64, %v85
  %v92 = vmul.f32 %v69, %v85
  %v93 = vmul.f32 %v74, %v85
  %v94 = vmul.f32 %v79, %v85
  %v95 = vadd.f32 %v38, %v87
  %v96 = vadd.f32 %v38, %v88
  %v97 = vadd.f32 %v38, %v89
  %v98 = vadd.f32 %v38, %v90
  %v99 = vadd.f32 %v38, %v91
  %v100 = vadd.f32 %v38, %v92
  %v101 = vadd.f32 %v38, %v93
  %v102 = vadd.f32 %v38, %v94
  %103 = vst [vmem:[#allocation2] sm:$0xff] %v95
  %104 = vst [vmem:[#allocation2 + $0x8] sm:$0xff] %v96
  %105 = vst [vmem:[#allocation2 + $0x10] sm:$0xff] %v97
  %106 = vst [vmem:[#allocation2 + $0x18] sm:$0xff] %v98
  %107 = vst [vmem:[#allocation2 + $0x20] sm:$0xff] %v99
  %108 = vst [vmem:[#allocation2 + $0x28] sm:$0xff] %v100
  %109 = vst [vmem:[#allocation2 + $0x30] sm:$0xff] %v101
  %110 = vst [vmem:[#allocation2 + $0x38] sm:$0xff] %v102
  %v111 = vld [vmem:[%s2] sm:$0xff]
  %v112 = vld [vmem:[%s2 + $0x8] sm:$0x3]
  %v113 = vld [vmem:[#allocation2] sm:$0xff]
  %vm114 = vcmask 80896
  %v116 = vsel %vm114, 0.0, 0
  %vm118 = vcmask 1041408
  %v120 = vsel %vm118, %v112, 0
  %122 = vmatprep.subr.mxu0 0.0
  %123 = vmatpush1.msra.mxu0 %v111
  %124 = vmatprep.subr.mxu0 0.0
  %125 = vmatpush1.msra.mxu0 %v120
  %126 = vmatprep.subr.mxu0 0.0
  %127 = vmatpush1.msra.mxu0 0.0
  %128 = vmatprep.subr.mxu0 0.0
  %129 = vmatpush1.msra.mxu0 0.0
  %130 = vmatprep.subr.mxu0 0.0
  %131 = vmatpush1.msra.mxu0 0.0
  %132 = vmatprep.subr.mxu0 0.0
  %133 = vmatpush1.msra.mxu0 0.0
  %134 = vmatprep.subr.mxu0 0.0
  %135 = vmatpush1.msra.mxu0 0.0
  %136 = vmatprep.subr.mxu0 0.0
  %137 = vmatpush1.msra.mxu0 0.0
  %138 = vmatprep.subr.mxu0 0.0
  %139 = vmatpush1.msra.mxu0 0.0
  %140 = vmatprep.subr.mxu0 0.0
  %141 = vmatpush1.msra.mxu0 0.0
  %142 = vmatprep.subr.mxu0 0.0
  %143 = vmatpush1.msra.mxu0 0.0
  %144 = vmatprep.subr.mxu0 0.0
  %145 = vmatpush1.msra.mxu0 0.0
  %146 = vmatprep.subr.mxu0 0.0
  %147 = vmatpush1.msra.mxu0 0.0
  %148 = vmatprep.subr.mxu0 0.0
  %149 = vmatpush1.msra.mxu0 0.0
  %150 = vmatprep.subr.mxu0 0.0
  %151 = vmatpush1.msra.mxu0 0.0
  %152 = vmatprep.subr.mxu0 0.0
  %153 = vmatpush1.msra.mxu0 0.0
  %154 = vmatprep.subr.mxu0 0.0
  %155 = vmatpush1.msra.mxu0 0.0
  %156 = vmatprep.subr.mxu0 0.0
  %157 = vmatpush1.msra.mxu0 0.0
  %158 = vmatprep.subr.mxu0 0.0
  %159 = vmatpush1.msra.mxu0 0.0
  %160 = vmatprep.subr.mxu0 0.0
  %161 = vmatpush1.msra.mxu0 0.0
  %162 = vmatprep.subr.mxu0 0.0
  %163 = vmatpush1.msra.mxu0 0.0
  %164 = vmatprep.subr.mxu0 0.0
  %165 = vmatpush1.msra.mxu0 0.0
  %166 = vmatprep.subr.mxu0 0.0
  %167 = vmatpush1.msra.mxu0 0.0
  %168 = vmatprep.subr.mxu0 0.0
  %169 = vmatpush1.msra.mxu0 0.0
  %170 = vmatprep.subr.mxu0 0.0
  %171 = vmatpush1.msra.mxu0 0.0
  %172 = vmatprep.subr.mxu0 0.0
  %173 = vmatpush1.msra.mxu0 0.0
  %174 = vmatprep.subr.mxu0 0.0
  %175 = vmatpush1.msra.mxu0 0.0
  %176 = vmatprep.subr.mxu0 0.0
  %177 = vmatpush1.msra.mxu0 0.0
  %178 = vmatprep.subr.mxu0 0.0
  %179 = vmatpush1.msra.mxu0 0.0
  %180 = vmatprep.subr.mxu0 0.0
  %181 = vmatpush1.msra.mxu0 0.0
  %182 = vmatprep.subr.mxu0 0.0
  %183 = vmatpush1.msra.mxu0 0.0
  %184 = vmatprep.subr.mxu0 0.0
  %185 = vmatpush1.msra.mxu0 0.0
  %186 = vmatprep.mubr.f32.mxu0 0.0
  %187 = vmatmul.mubr.f32.gmra.mrb[0].mxu0 %v116
  %v188 = vpop.f32.mrb[0].mxu0
  %v189 = vadd.f32 0.0, %v188
  %v190 = vpop.f32.mrb[0].mxu0
  %191 = vdwg.mxu0
  %v192 = vadd.f32 %v113, %v189
  %v193 = vxor.u32 %v192, 2147483648
  %v194 = vmul.f32 %v193, 1.442695
  %v195 = vpow.pop %v194
  %v196 = vadd.f32 %v195, 1.0
  %v197 = vrcp.pop %v196
  %v198 = vmul.f32 1.0, %v197
  %v199 = vtanh.pop %v192
  %v200 = vmul.f32 %v198, 0.0
  %202 = vrot.lane.b32.xlu0 %v199, 108
  %v203 = vpop.permute.xlu0 %202
  %v205 = vmul.f32 %v198, %v203
  %207 = vrot.lane.b32.xlu0 %v205, 10
  %v208 = vpop.permute.xlu0 %207
  %v210 = vadd.f32 %v200, %v208
  %v211 = vtanh.pop %v210
  %213 = vrot.lane.b32.xlu0 %v211, 20
  %v214 = vpop.permute.xlu0 %213
  %v216 = vmul.f32 %v198, %v214
  %s217 = scalar_lea.vmem [#allocation2], 8
  %v218 = vld [vmem:[%s217] sm:$0xff]
  %220 = vrot.lane.b32.xlu0 %v216, 98
  %v221 = vpop.permute.xlu0 %220
  %v222 = vsel %vm114, %v221, 0
  %224 = vmatprep.subr.mxu0 0.0
  %225 = vmatpush1.msra.mxu0 %v111
  %226 = vmatprep.subr.mxu0 0.0
  %227 = vmatpush1.msra.mxu0 %v120
  %228 = vmatprep.subr.mxu0 0.0
  %229 = vmatpush1.msra.mxu0 0.0
  %230 = vmatprep.subr.mxu0 0.0
  %231 = vmatpush1.msra.mxu0 0.0
  %232 = vmatprep.subr.mxu0 0.0
  %233 = vmatpush1.msra.mxu0 0.0
  %234 = vmatprep.subr.mxu0 0.0
  %235 = vmatpush1.msra.mxu0 0.0
  %236 = vmatprep.subr.mxu0 0.0
  %237 = vmatpush1.msra.mxu0 0.0
  %238 = vmatprep.subr.mxu0 0.0
  %239 = vmatpush1.msra.mxu0 0.0
  %240 = vmatprep.subr.mxu0 0.0
  %241 = vmatpush1.msra.mxu0 0.0
  %242 = vmatprep.subr.mxu0 0.0
  %243 = vmatpush1.msra.mxu0 0.0
  %244 = vmatprep.subr.mxu0 0.0
  %245 = vmatpush1.msra.mxu0 0.0
  %246 = vmatprep.subr.mxu0 0.0
  %247 = vmatpush1.msra.mxu0 0.0
  %248 = vmatprep.subr.mxu0 0.0
  %249 = vmatpush1.msra.mxu0 0.0
  %250 = vmatprep.subr.mxu0 0.0
  %251 = vmatpush1.msra.mxu0 0.0
  %252 = vmatprep.subr.mxu0 0.0
  %253 = vmatpush1.msra.mxu0 0.0
  %254 = vmatprep.subr.mxu0 0.0
  %255 = vmatpush1.msra.mxu0 0.0
  %256 = vmatprep.subr.mxu0 0.0
  %257 = vmatpush1.msra.mxu0 0.0
  %258 = vmatprep.subr.mxu0 0.0
  %259 = vmatpush1.msra.mxu0 0.0
  %260 = vmatprep.subr.mxu0 0.0
  %261 = vmatpush1.msra.mxu0 0.0
  %262 = vmatprep.subr.mxu0 0.0
  %263 = vmatpush1.msra.mxu0 0.0
  %264 = vmatprep.subr.mxu0 0.0
  %265 = vmatpush1.msra.mxu0 0.0
  %266 = vmatprep.subr.mxu0 0.0
  %267 = vmatpush1.msra.mxu0 0.0
  %268 = vmatprep.subr.mxu0 0.0
  %269 = vmatpush1.msra.mxu0 0.0
  %270 = vmatprep.subr.mxu0 0.0
  %271 = vmatpush1.msra.mxu0 0.0
  %272 = vmatprep.subr.mxu0 0.0
  %273 = vmatpush1.msra.mxu0 0.0
  %274 = vmatprep.subr.mxu0 0.0
  %275 = vmatpush1.msra.mxu0 0.0
  %276 = vmatprep.subr.mxu0 0.0
  %277 = vmatpush1.msra.mxu0 0.0
  %278 = vmatprep.subr.mxu0 0.0
  %279 = vmatpush1.msra.mxu0 0.0
  %280 = vmatprep.subr.mxu0 0.0
  %281 = vmatpush1.msra.mxu0 0.0
  %282 = vmatprep.subr.mxu0 0.0
  %283 = vmatpush1.msra.mxu0 0.0
  %284 = vmatprep.subr.mxu0 0.0
  %285 = vmatpush1.msra.mxu0 0.0
  %286 = vmatprep.subr.mxu0 0.0
  %287 = vmatpush1.msra.mxu0 0.0
  %288 = vmatprep.mubr.f32.mxu0 0.0
  %289 = vmatmul.mubr.f32.gmra.mrb[0].mxu0 %v222
  %v290 = vpop.f32.mrb[0].mxu0
  %v291 = vadd.f32 0.0, %v290
  %v292 = vpop.f32.mrb[0].mxu0
  %293 = vdwg.mxu0
  %v294 = vadd.f32 %v218, %v291
  %v295 = vxor.u32 %v294, 2147483648
  %v296 = vmul.f32 %v295, 1.442695
  %v297 = vpow.pop %v296
  %v298 = vadd.f32 %v297, 1.0
  %v299 = vrcp.pop %v298
  %v300 = vmul.f32 1.0, %v299
  %v301 = vtanh.pop %v294
  %v302 = vmul.f32 %v300, %v210
  %304 = vrot.lane.b32.xlu0 %v301, 108
  %v305 = vpop.permute.xlu0 %304
  %v307 = vmul.f32 %v300, %v305
  %309 = vrot.lane.b32.xlu0 %v307, 10
  %v310 = vpop.permute.xlu0 %309
  %v312 = vadd.f32 %v302, %v310
  %v313 = vtanh.pop %v312
  %315 = vrot.lane.b32.xlu0 %v313, 20
  %v316 = vpop.permute.xlu0 %315
  %v318 = vmul.f32 %v300, %v316
  %s319 = scalar_lea.vmem [#allocation2], 16
  %v320 = vld [vmem:[%s319] sm:$0xff]
  %322 = vrot.lane.b32.xlu0 %v318, 98
  %v323 = vpop.permute.xlu0 %322
  %v324 = vsel %vm114, %v323, 0
  %326 = vmatprep.subr.mxu0 0.0
  %327 = vmatpush1.msra.mxu0 %v111
  %328 = vmatprep.subr.mxu0 0.0
  %329 = vmatpush1.msra.mxu0 %v120
  %330 = vmatprep.subr.mxu0 0.0
  %331 = vmatpush1.msra.mxu0 0.0
  %332 = vmatprep.subr.mxu0 0.0
  %333 = vmatpush1.msra.mxu0 0.0
  %334 = vmatprep.subr.mxu0 0.0
  %335 = vmatpush1.msra.mxu0 0.0
  %336 = vmatprep.subr.mxu0 0.0
  %337 = vmatpush1.msra.mxu0 0.0
  %338 = vmatprep.subr.mxu0 0.0
  %339 = vmatpush1.msra.mxu0 0.0
  %340 = vmatprep.subr.mxu0 0.0
  %341 = vmatpush1.msra.mxu0 0.0
  %342 = vmatprep.subr.mxu0 0.0
  %343 = vmatpush1.msra.mxu0 0.0
  %344 = vmatprep.subr.mxu0 0.0
  %345 = vmatpush1.msra.mxu0 0.0
  %346 = vmatprep.subr.mxu0 0.0
  %347 = vmatpush1.msra.mxu0 0.0
  %348 = vmatprep.subr.mxu0 0.0
  %349 = vmatpush1.msra.mxu0 0.0
  %350 = vmatprep.subr.mxu0 0.0
  %351 = vmatpush1.msra.mxu0 0.0
  %352 = vmatprep.subr.mxu0 0.0
  %353 = vmatpush1.msra.mxu0 0.0
  %354 = vmatprep.subr.mxu0 0.0
  %355 = vmatpush1.msra.mxu0 0.0
  %356 = vmatprep.subr.mxu0 0.0
  %357 = vmatpush1.msra.mxu0 0.0
  %358 = vmatprep.subr.mxu0 0.0
  %359 = vmatpush1.msra.mxu0 0.0
  %360 = vmatprep.subr.mxu0 0.0
  %361 = vmatpush1.msra.mxu0 0.0
  %362 = vmatprep.subr.mxu0 0.0
  %363 = vmatpush1.msra.mxu0 0.0
  %364 = vmatprep.subr.mxu0 0.0
  %365 = vmatpush1.msra.mxu0 0.0
  %366 = vmatprep.subr.mxu0 0.0
  %367 = vmatpush1.msra.mxu0 0.0
  %368 = vmatprep.subr.mxu0 0.0
  %369 = vmatpush1.msra.mxu0 0.0
  %370 = vmatprep.subr.mxu0 0.0
  %371 = vmatpush1.msra.mxu0 0.0
  %372 = vmatprep.subr.mxu0 0.0
  %373 = vmatpush1.msra.mxu0 0.0
  %374 = vmatprep.subr.mxu0 0.0
  %375 = vmatpush1.msra.mxu0 0.0
  %376 = vmatprep.subr.mxu0 0.0
  %377 = vmatpush1.msra.mxu0 0.0
  %378 = vmatprep.subr.mxu0 0.0
  %379 = vmatpush1.msra.mxu0 0.0
  %380 = vmatprep.subr.mxu0 0.0
  %381 = vmatpush1.msra.mxu0 0.0
  %382 = vmatprep.subr.mxu0 0.0
  %383 = vmatpush1.msra.mxu0 0.0
  %384 = vmatprep.subr.mxu0 0.0
  %385 = vmatpush1.msra.mxu0 0.0
  %386 = vmatprep.subr.mxu0 0.0
  %387 = vmatpush1.msra.mxu0 0.0
  %388 = vmatprep.subr.mxu0 0.0
  %389 = vmatpush1.msra.mxu0 0.0
  %390 = vmatprep.mubr.f32.mxu0 0.0
  %391 = vmatmul.mubr.f32.gmra.mrb[0].mxu0 %v324
  %v392 = vpop.f32.mrb[0].mxu0
  %v393 = vadd.f32 0.0, %v392
  %v394 = vpop.f32.mrb[0].mxu0
  %395 = vdwg.mxu0
  %v396 = vadd.f32 %v320, %v393
  %v397 = vxor.u32 %v396, 2147483648
  %v398 = vmul.f32 %v397, 1.442695
  %v399 = vpow.pop %v398
  %v400 = vadd.f32 %v399, 1.0
  %v401 = vrcp.pop %v400
  %v402 = vmul.f32 1.0, %v401
  %v403 = vtanh.pop %v396
  %v404 = vmul.f32 %v402, %v312
  %406 = vrot.lane.b32.xlu0 %v403, 108
  %v407 = vpop.permute.xlu0 %406
  %v409 = vmul.f32 %v402, %v407
  %411 = vrot.lane.b32.xlu0 %v409, 10
  %v412 = vpop.permute.xlu0 %411
  %v414 = vadd.f32 %v404, %v412
  %v415 = vtanh.pop %v414
  %417 = vrot.lane.b32.xlu0 %v415, 20
  %v418 = vpop.permute.xlu0 %417
  %v420 = vmul.f32 %v402, %v418
  %s421 = scalar_lea.vmem [#allocation2], 24
  %v422 = vld [vmem:[%s421] sm:$0xff]
  %424 = vrot.lane.b32.xlu0 %v420, 98
  %v425 = vpop.permute.xlu0 %424
  %v426 = vsel %vm114, %v425, 0
  %428 = vmatprep.subr.mxu0 0.0
  %429 = vmatpush1.msra.mxu0 %v111
  %430 = vmatprep.subr.mxu0 0.0
  %431 = vmatpush1.msra.mxu0 %v120
  %432 = vmatprep.subr.mxu0 0.0
  %433 = vmatpush1.msra.mxu0 0.0
  %434 = vmatprep.subr.mxu0 0.0
  %435 = vmatpush1.msra.mxu0 0.0
  %436 = vmatprep.subr.mxu0 0.0
  %437 = vmatpush1.msra.mxu0 0.0
  %438 = vmatprep.subr.mxu0 0.0
  %439 = vmatpush1.msra.mxu0 0.0
  %440 = vmatprep.subr.mxu0 0.0
  %441 = vmatpush1.msra.mxu0 0.0
  %442 = vmatprep.subr.mxu0 0.0
  %443 = vmatpush1.msra.mxu0 0.0
  %444 = vmatprep.subr.mxu0 0.0
  %445 = vmatpush1.msra.mxu0 0.0
  %446 = vmatprep.subr.mxu0 0.0
  %447 = vmatpush1.msra.mxu0 0.0
  %448 = vmatprep.subr.mxu0 0.0
  %449 = vmatpush1.msra.mxu0 0.0
  %450 = vmatprep.subr.mxu0 0.0
  %451 = vmatpush1.msra.mxu0 0.0
  %452 = vmatprep.subr.mxu0 0.0
  %453 = vmatpush1.msra.mxu0 0.0
  %454 = vmatprep.subr.mxu0 0.0
  %455 = vmatpush1.msra.mxu0 0.0
  %456 = vmatprep.subr.mxu0 0.0
  %457 = vmatpush1.msra.mxu0 0.0
  %458 = vmatprep.subr.mxu0 0.0
  %459 = vmatpush1.msra.mxu0 0.0
  %460 = vmatprep.subr.mxu0 0.0
  %461 = vmatpush1.msra.mxu0 0.0
  %462 = vmatprep.subr.mxu0 0.0
  %463 = vmatpush1.msra.mxu0 0.0
  %464 = vmatprep.subr.mxu0 0.0
  %465 = vmatpush1.msra.mxu0 0.0
  %466 = vmatprep.subr.mxu0 0.0
  %467 = vmatpush1.msra.mxu0 0.0
  %468 = vmatprep.subr.mxu0 0.0
  %469 = vmatpush1.msra.mxu0 0.0
  %470 = vmatprep.subr.mxu0 0.0
  %471 = vmatpush1.msra.mxu0 0.0
  %472 = vmatprep.subr.mxu0 0.0
  %473 = vmatpush1.msra.mxu0 0.0
  %474 = vmatprep.subr.mxu0 0.0
  %475 = vmatpush1.msra.mxu0 0.0
  %476 = vmatprep.subr.mxu0 0.0
  %477 = vmatpush1.msra.mxu0 0.0
  %478 = vmatprep.subr.mxu0 0.0
  %479 = vmatpush1.msra.mxu0 0.0
  %480 = vmatprep.subr.mxu0 0.0
  %481 = vmatpush1.msra.mxu0 0.0
  %482 = vmatprep.subr.mxu0 0.0
  %483 = vmatpush1.msra.mxu0 0.0
  %484 = vmatprep.subr.mxu0 0.0
  %485 = vmatpush1.msra.mxu0 0.0
  %486 = vmatprep.subr.mxu0 0.0
  %487 = vmatpush1.msra.mxu0 0.0
  %488 = vmatprep.subr.mxu0 0.0
  %489 = vmatpush1.msra.mxu0 0.0
  %490 = vmatprep.subr.mxu0 0.0
  %491 = vmatpush1.msra.mxu0 0.0
  %492 = vmatprep.mubr.f32.mxu0 0.0
  %493 = vmatmul.mubr.f32.gmra.mrb[0].mxu0 %v426
  %v494 = vpop.f32.mrb[0].mxu0
  %v495 = vadd.f32 0.0, %v494
  %v496 = vpop.f32.mrb[0].mxu0
  %497 = vdwg.mxu0
  %v498 = vadd.f32 %v422, %v495
  %v499 = vxor.u32 %v498, 2147483648
  %v500 = vmul.f32 %v499, 1.442695
  %v501 = vpow.pop %v500
  %v502 = vadd.f32 %v501, 1.0
  %v503 = vrcp.pop %v502
  %v504 = vmul.f32 1.0, %v503
  %v505 = vtanh.pop %v498
  %v506 = vmul.f32 %v504, %v414
  %508 = vrot.lane.b32.xlu0 %v505, 108
  %v509 = vpop.permute.xlu0 %508
  %v511 = vmul.f32 %v504, %v509
  %513 = vrot.lane.b32.xlu0 %v511, 10
  %v514 = vpop.permute.xlu0 %513
  %v516 = vadd.f32 %v506, %v514
  %v517 = vtanh.pop %v516
  %519 = vrot.lane.b32.xlu0 %v517, 20
  %v520 = vpop.permute.xlu0 %519
  %v522 = vmul.f32 %v504, %v520
  %s523 = scalar_lea.vmem [#allocation2], 32
  %v524 = vld [vmem:[%s523] sm:$0xff]
  %526 = vrot.lane.b32.xlu0 %v522, 98
  %v527 = vpop.permute.xlu0 %526
  %v528 = vsel %vm114, %v527, 0
  %530 = vmatprep.subr.mxu0 0.0
  %531 = vmatpush1.msra.mxu0 %v111
  %532 = vmatprep.subr.mxu0 0.0
  %533 = vmatpush1.msra.mxu0 %v120
  %534 = vmatprep.subr.mxu0 0.0
  %535 = vmatpush1.msra.mxu0 0.0
  %536 = vmatprep.subr.mxu0 0.0
  %537 = vmatpush1.msra.mxu0 0.0
  %538 = vmatprep.subr.mxu0 0.0
  %539 = vmatpush1.msra.mxu0 0.0
  %540 = vmatprep.subr.mxu0 0.0
  %541 = vmatpush1.msra.mxu0 0.0
  %542 = vmatprep.subr.mxu0 0.0
  %543 = vmatpush1.msra.mxu0 0.0
  %544 = vmatprep.subr.mxu0 0.0
  %545 = vmatpush1.msra.mxu0 0.0
  %546 = vmatprep.subr.mxu0 0.0
  %547 = vmatpush1.msra.mxu0 0.0
  %548 = vmatprep.subr.mxu0 0.0
  %549 = vmatpush1.msra.mxu0 0.0
  %550 = vmatprep.subr.mxu0 0.0
  %551 = vmatpush1.msra.mxu0 0.0
  %552 = vmatprep.subr.mxu0 0.0
  %553 = vmatpush1.msra.mxu0 0.0
  %554 = vmatprep.subr.mxu0 0.0
  %555 = vmatpush1.msra.mxu0 0.0
  %556 = vmatprep.subr.mxu0 0.0
  %557 = vmatpush1.msra.mxu0 0.0
  %558 = vmatprep.subr.mxu0 0.0
  %559 = vmatpush1.msra.mxu0 0.0
  %560 = vmatprep.subr.mxu0 0.0
  %561 = vmatpush1.msra.mxu0 0.0
  %562 = vmatprep.subr.mxu0 0.0
  %563 = vmatpush1.msra.mxu0 0.0
  %564 = vmatprep.subr.mxu0 0.0
  %565 = vmatpush1.msra.mxu0 0.0
  %566 = vmatprep.subr.mxu0 0.0
  %567 = vmatpush1.msra.mxu0 0.0
  %568 = vmatprep.subr.mxu0 0.0
  %569 = vmatpush1.msra.mxu0 0.0
  %570 = vmatprep.subr.mxu0 0.0
  %571 = vmatpush1.msra.mxu0 0.0
  %572 = vmatprep.subr.mxu0 0.0
  %573 = vmatpush1.msra.mxu0 0.0
  %574 = vmatprep.subr.mxu0 0.0
  %575 = vmatpush1.msra.mxu0 0.0
  %576 = vmatprep.subr.mxu0 0.0
  %577 = vmatpush1.msra.mxu0 0.0
  %578 = vmatprep.subr.mxu0 0.0
  %579 = vmatpush1.msra.mxu0 0.0
  %580 = vmatprep.subr.mxu0 0.0
  %581 = vmatpush1.msra.mxu0 0.0
  %582 = vmatprep.subr.mxu0 0.0
  %583 = vmatpush1.msra.mxu0 0.0
  %584 = vmatprep.subr.mxu0 0.0
  %585 = vmatpush1.msra.mxu0 0.0
  %586 = vmatprep.subr.mxu0 0.0
  %587 = vmatpush1.msra.mxu0 0.0
  %588 = vmatprep.subr.mxu0 0.0
  %589 = vmatpush1.msra.mxu0 0.0
  %590 = vmatprep.subr.mxu0 0.0
  %591 = vmatpush1.msra.mxu0 0.0
  %592 = vmatprep.subr.mxu0 0.0
  %593 = vmatpush1.msra.mxu0 0.0
  %594 = vmatprep.mubr.f32.mxu0 0.0
  %595 = vmatmul.mubr.f32.gmra.mrb[0].mxu0 %v528
  %v596 = vpop.f32.mrb[0].mxu0
  %v597 = vadd.f32 0.0, %v596
  %v598 = vpop.f32.mrb[0].mxu0
  %599 = vdwg.mxu0
  %v600 = vadd.f32 %v524, %v597
  %v601 = vxor.u32 %v600, 2147483648
  %v602 = vmul.f32 %v601, 1.442695
  %v603 = vpow.pop %v602
  %v604 = vadd.f32 %v603, 1.0
  %v605 = vrcp.pop %v604
  %v606 = vmul.f32 1.0, %v605
  %v607 = vtanh.pop %v600
  %v608 = vmul.f32 %v606, %v516
  %610 = vrot.lane.b32.xlu0 %v607, 108
  %v611 = vpop.permute.xlu0 %610
  %v613 = vmul.f32 %v606, %v611
  %615 = vrot.lane.b32.xlu0 %v613, 10
  %v616 = vpop.permute.xlu0 %615
  %v618 = vadd.f32 %v608, %v616
  %v619 = vtanh.pop %v618
  %621 = vrot.lane.b32.xlu0 %v619, 20
  %v622 = vpop.permute.xlu0 %621
  %v624 = vmul.f32 %v606, %v622
  %s625 = scalar_lea.vmem [#allocation2], 40
  %v626 = vld [vmem:[%s625] sm:$0xff]
  %628 = vrot.lane.b32.xlu0 %v624, 98
  %v629 = vpop.permute.xlu0 %628
  %v630 = vsel %vm114, %v629, 0
  %632 = vmatprep.subr.mxu0 0.0
  %633 = vmatpush1.msra.mxu0 %v111
  %634 = vmatprep.subr.mxu0 0.0
  %635 = vmatpush1.msra.mxu0 %v120
  %636 = vmatprep.subr.mxu0 0.0
  %637 = vmatpush1.msra.mxu0 0.0
  %638 = vmatprep.subr.mxu0 0.0
  %639 = vmatpush1.msra.mxu0 0.0
  %640 = vmatprep.subr.mxu0 0.0
  %641 = vmatpush1.msra.mxu0 0.0
  %642 = vmatprep.subr.mxu0 0.0
  %643 = vmatpush1.msra.mxu0 0.0
  %644 = vmatprep.subr.mxu0 0.0
  %645 = vmatpush1.msra.mxu0 0.0
  %646 = vmatprep.subr.mxu0 0.0
  %647 = vmatpush1.msra.mxu0 0.0
  %648 = vmatprep.subr.mxu0 0.0
  %649 = vmatpush1.msra.mxu0 0.0
  %650 = vmatprep.subr.mxu0 0.0
  %651 = vmatpush1.msra.mxu0 0.0
  %652 = vmatprep.subr.mxu0 0.0
  %653 = vmatpush1.msra.mxu0 0.0
  %654 = vmatprep.subr.mxu0 0.0
  %655 = vmatpush1.msra.mxu0 0.0
  %656 = vmatprep.subr.mxu0 0.0
  %657 = vmatpush1.msra.mxu0 0.0
  %658 = vmatprep.subr.mxu0 0.0
  %659 = vmatpush1.msra.mxu0 0.0
  %660 = vmatprep.subr.mxu0 0.0
  %661 = vmatpush1.msra.mxu0 0.0
  %662 = vmatprep.subr.mxu0 0.0
  %663 = vmatpush1.msra.mxu0 0.0
  %664 = vmatprep.subr.mxu0 0.0
  %665 = vmatpush1.msra.mxu0 0.0
  %666 = vmatprep.subr.mxu0 0.0
  %667 = vmatpush1.msra.mxu0 0.0
  %668 = vmatprep.subr.mxu0 0.0
  %669 = vmatpush1.msra.mxu0 0.0
  %670 = vmatprep.subr.mxu0 0.0
  %671 = vmatpush1.msra.mxu0 0.0
  %672 = vmatprep.subr.mxu0 0.0
  %673 = vmatpush1.msra.mxu0 0.0
  %674 = vmatprep.subr.mxu0 0.0
  %675 = vmatpush1.msra.mxu0 0.0
  %676 = vmatprep.subr.mxu0 0.0
  %677 = vmatpush1.msra.mxu0 0.0
  %678 = vmatprep.subr.mxu0 0.0
  %679 = vmatpush1.msra.mxu0 0.0
  %680 = vmatprep.subr.mxu0 0.0
  %681 = vmatpush1.msra.mxu0 0.0
  %682 = vmatprep.subr.mxu0 0.0
  %683 = vmatpush1.msra.mxu0 0.0
  %684 = vmatprep.subr.mxu0 0.0
  %685 = vmatpush1.msra.mxu0 0.0
  %686 = vmatprep.subr.mxu0 0.0
  %687 = vmatpush1.msra.mxu0 0.0
  %688 = vmatprep.subr.mxu0 0.0
  %689 = vmatpush1.msra.mxu0 0.0
  %690 = vmatprep.subr.mxu0 0.0
  %691 = vmatpush1.msra.mxu0 0.0
  %692 = vmatprep.subr.mxu0 0.0
  %693 = vmatpush1.msra.mxu0 0.0
  %694 = vmatprep.subr.mxu0 0.0
  %695 = vmatpush1.msra.mxu0 0.0
  %696 = vmatprep.mubr.f32.mxu0 0.0
  %697 = vmatmul.mubr.f32.gmra.mrb[0].mxu0 %v630
  %v698 = vpop.f32.mrb[0].mxu0
  %v699 = vadd.f32 0.0, %v698
  %v700 = vpop.f32.mrb[0].mxu0
  %701 = vdwg.mxu0
  %v702 = vadd.f32 %v626, %v699
  %v703 = vxor.u32 %v702, 2147483648
  %v704 = vmul.f32 %v703, 1.442695
  %v705 = vpow.pop %v704
  %v706 = vadd.f32 %v705, 1.0
  %v707 = vrcp.pop %v706
  %v708 = vmul.f32 1.0, %v707
  %v709 = vtanh.pop %v702
  %v710 = vmul.f32 %v708, %v618
  %712 = vrot.lane.b32.xlu0 %v709, 108
  %v713 = vpop.permute.xlu0 %712
  %v715 = vmul.f32 %v708, %v713
  %717 = vrot.lane.b32.xlu0 %v715, 10
  %v718 = vpop.permute.xlu0 %717
  %v720 = vadd.f32 %v710, %v718
  %v721 = vtanh.pop %v720
  %723 = vrot.lane.b32.xlu0 %v721, 20
  %v724 = vpop.permute.xlu0 %723
  %v726 = vmul.f32 %v708, %v724
  %s727 = scalar_lea.vmem [#allocation2], 48
  %v728 = vld [vmem:[%s727] sm:$0xff]
  %730 = vrot.lane.b32.xlu0 %v726, 98
  %v731 = vpop.permute.xlu0 %730
  %v732 = vsel %vm114, %v731, 0
  %734 = vmatprep.subr.mxu0 0.0
  %735 = vmatpush1.msra.mxu0 %v111
  %736 = vmatprep.subr.mxu0 0.0
  %737 = vmatpush1.msra.mxu0 %v120
  %738 = vmatprep.subr.mxu0 0.0
  %739 = vmatpush1.msra.mxu0 0.0
  %740 = vmatprep.subr.mxu0 0.0
  %741 = vmatpush1.msra.mxu0 0.0
  %742 = vmatprep.subr.mxu0 0.0
  %743 = vmatpush1.msra.mxu0 0.0
  %744 = vmatprep.subr.mxu0 0.0
  %745 = vmatpush1.msra.mxu0 0.0
  %746 = vmatprep.subr.mxu0 0.0
  %747 = vmatpush1.msra.mxu0 0.0
  %748 = vmatprep.subr.mxu0 0.0
  %749 = vmatpush1.msra.mxu0 0.0
  %750 = vmatprep.subr.mxu0 0.0
  %751 = vmatpush1.msra.mxu0 0.0
  %752 = vmatprep.subr.mxu0 0.0
  %753 = vmatpush1.msra.mxu0 0.0
  %754 = vmatprep.subr.mxu0 0.0
  %755 = vmatpush1.msra.mxu0 0.0
  %756 = vmatprep.subr.mxu0 0.0
  %757 = vmatpush1.msra.mxu0 0.0
  %758 = vmatprep.subr.mxu0 0.0
  %759 = vmatpush1.msra.mxu0 0.0
  %760 = vmatprep.subr.mxu0 0.0
  %761 = vmatpush1.msra.mxu0 0.0
  %762 = vmatprep.subr.mxu0 0.0
  %763 = vmatpush1.msra.mxu0 0.0
  %764 = vmatprep.subr.mxu0 0.0
  %765 = vmatpush1.msra.mxu0 0.0
  %766 = vmatprep.subr.mxu0 0.0
  %767 = vmatpush1.msra.mxu0 0.0
  %768 = vmatprep.subr.mxu0 0.0
  %769 = vmatpush1.msra.mxu0 0.0
  %770 = vmatprep.subr.mxu0 0.0
  %771 = vmatpush1.msra.mxu0 0.0
  %772 = vmatprep.subr.mxu0 0.0
  %773 = vmatpush1.msra.mxu0 0.0
  %774 = vmatprep.subr.mxu0 0.0
  %775 = vmatpush1.msra.mxu0 0.0
  %776 = vmatprep.subr.mxu0 0.0
  %777 = vmatpush1.msra.mxu0 0.0
  %778 = vmatprep.subr.mxu0 0.0
  %779 = vmatpush1.msra.mxu0 0.0
  %780 = vmatprep.subr.mxu0 0.0
  %781 = vmatpush1.msra.mxu0 0.0
  %782 = vmatprep.subr.mxu0 0.0
  %783 = vmatpush1.msra.mxu0 0.0
  %784 = vmatprep.subr.mxu0 0.0
  %785 = vmatpush1.msra.mxu0 0.0
  %786 = vmatprep.subr.mxu0 0.0
  %787 = vmatpush1.msra.mxu0 0.0
  %788 = vmatprep.subr.mxu0 0.0
  %789 = vmatpush1.msra.mxu0 0.0
  %790 = vmatprep.subr.mxu0 0.0
  %791 = vmatpush1.msra.mxu0 0.0
  %792 = vmatprep.subr.mxu0 0.0
  %793 = vmatpush1.msra.mxu0 0.0
  %794 = vmatprep.subr.mxu0 0.0
  %795 = vmatpush1.msra.mxu0 0.0
  %796 = vmatprep.subr.mxu0 0.0
  %797 = vmatpush1.msra.mxu0 0.0
  %798 = vmatprep.mubr.f32.mxu0 0.0
  %799 = vmatmul.mubr.f32.gmra.mrb[0].mxu0 %v732
  %v800 = vpop.f32.mrb[0].mxu0
  %v801 = vadd.f32 0.0, %v800
  %v802 = vpop.f32.mrb[0].mxu0
  %803 = vdwg.mxu0
  %v804 = vadd.f32 %v728, %v801
  %v805 = vxor.u32 %v804, 2147483648
  %v806 = vmul.f32 %v805, 1.442695
  %v807 = vpow.pop %v806
  %v808 = vadd.f32 %v807, 1.0
  %v809 = vrcp.pop %v808
  %v810 = vmul.f32 1.0, %v809
  %v811 = vtanh.pop %v804
  %v812 = vmul.f32 %v810, %v720
  %814 = vrot.lane.b32.xlu0 %v811, 108
  %v815 = vpop.permute.xlu0 %814
  %v817 = vmul.f32 %v810, %v815
  %819 = vrot.lane.b32.xlu0 %v817, 10
  %v820 = vpop.permute.xlu0 %819
  %v822 = vadd.f32 %v812, %v820
  %v823 = vtanh.pop %v822
  %825 = vrot.lane.b32.xlu0 %v823, 20
  %v826 = vpop.permute.xlu0 %825
  %v828 = vmul.f32 %v810, %v826
  %s829 = scalar_lea.vmem [#allocation2], 56
  %v830 = vld [vmem:[%s829] sm:$0xff]
  %832 = vrot.lane.b32.xlu0 %v828, 98
  %v833 = vpop.permute.xlu0 %832
  %v834 = vsel %vm114, %v833, 0
  %836 = vmatprep.subr.mxu0 0.0
  %837 = vmatpush1.msra.mxu0 %v111
  %838 = vmatprep.subr.mxu0 0.0
  %839 = vmatpush1.msra.mxu0 %v120
  %840 = vmatprep.subr.mxu0 0.0
  %841 = vmatpush1.msra.mxu0 0.0
  %842 = vmatprep.subr.mxu0 0.0
  %843 = vmatpush1.msra.mxu0 0.0
  %844 = vmatprep.subr.mxu0 0.0
  %845 = vmatpush1.msra.mxu0 0.0
  %846 = vmatprep.subr.mxu0 0.0
  %847 = vmatpush1.msra.mxu0 0.0
  %848 = vmatprep.subr.mxu0 0.0
  %849 = vmatpush1.msra.mxu0 0.0
  %850 = vmatprep.subr.mxu0 0.0
  %851 = vmatpush1.msra.mxu0 0.0
  %852 = vmatprep.subr.mxu0 0.0
  %853 = vmatpush1.msra.mxu0 0.0
  %854 = vmatprep.subr.mxu0 0.0
  %855 = vmatpush1.msra.mxu0 0.0
  %856 = vmatprep.subr.mxu0 0.0
  %857 = vmatpush1.msra.mxu0 0.0
  %858 = vmatprep.subr.mxu0 0.0
  %859 = vmatpush1.msra.mxu0 0.0
  %860 = vmatprep.subr.mxu0 0.0
  %861 = vmatpush1.msra.mxu0 0.0
  %862 = vmatprep.subr.mxu0 0.0
  %863 = vmatpush1.msra.mxu0 0.0
  %864 = vmatprep.subr.mxu0 0.0
  %865 = vmatpush1.msra.mxu0 0.0
  %866 = vmatprep.subr.mxu0 0.0
  %867 = vmatpush1.msra.mxu0 0.0
  %868 = vmatprep.subr.mxu0 0.0
  %869 = vmatpush1.msra.mxu0 0.0
  %870 = vmatprep.subr.mxu0 0.0
  %871 = vmatpush1.msra.mxu0 0.0
  %872 = vmatprep.subr.mxu0 0.0
  %873 = vmatpush1.msra.mxu0 0.0
  %874 = vmatprep.subr.mxu0 0.0
  %875 = vmatpush1.msra.mxu0 0.0
  %876 = vmatprep.subr.mxu0 0.0
  %877 = vmatpush1.msra.mxu0 0.0
  %878 = vmatprep.subr.mxu0 0.0
  %879 = vmatpush1.msra.mxu0 0.0
  %880 = vmatprep.subr.mxu0 0.0
  %881 = vmatpush1.msra.mxu0 0.0
  %882 = vmatprep.subr.mxu0 0.0
  %883 = vmatpush1.msra.mxu0 0.0
  %884 = vmatprep.subr.mxu0 0.0
  %885 = vmatpush1.msra.mxu0 0.0
  %886 = vmatprep.subr.mxu0 0.0
  %887 = vmatpush1.msra.mxu0 0.0
  %888 = vmatprep.subr.mxu0 0.0
  %889 = vmatpush1.msra.mxu0 0.0
  %890 = vmatprep.subr.mxu0 0.0
  %891 = vmatpush1.msra.mxu0 0.0
  %892 = vmatprep.subr.mxu0 0.0
  %893 = vmatpush1.msra.mxu0 0.0
  %894 = vmatprep.subr.mxu0 0.0
  %895 = vmatpush1.msra.mxu0 0.0
  %896 = vmatprep.subr.mxu0 0.0
  %897 = vmatpush1.msra.mxu0 0.0
  %898 = vmatprep.subr.mxu0 0.0
  %899 = vmatpush1.msra.mxu0 0.0
  %900 = vmatprep.mubr.f32.mxu0 0.0
  %901 = vmatmul.mubr.f32.gmra.mrb[0].mxu0 %v834
  %v902 = vpop.f32.mrb[0].mxu0
  %v903 = vadd.f32 0.0, %v902
  %v904 = vpop.f32.mrb[0].mxu0
  %905 = vdwg.mxu0
  %v906 = vadd.f32 %v830, %v903
  %v907 = vxor.u32 %v906, 2147483648
  %v908 = vmul.f32 %v907, 1.442695
  %v909 = vpow.pop %v908
  %v910 = vadd.f32 %v909, 1.0
  %v911 = vrcp.pop %v910
  %v912 = vmul.f32 1.0, %v911
  %v913 = vtanh.pop %v906
  %v914 = vmul.f32 %v912, %v822
  %916 = vrot.lane.b32.xlu0 %v913, 108
  %v917 = vpop.permute.xlu0 %916
  %v919 = vmul.f32 %v912, %v917
  %921 = vrot.lane.b32.xlu0 %v919, 10
  %v922 = vpop.permute.xlu0 %921
  %v924 = vadd.f32 %v914, %v922
  %v925 = vtanh.pop %v924
  %927 = vrot.lane.b32.xlu0 %v925, 20
  %v928 = vpop.permute.xlu0 %927
  %v930 = vmul.f32 %v912, %v928
  %v931 = vmax.f32 %v930, 0.0
  %v932 = vld [vmem:[%s4] sm:$0x1]
  %v934 = vlaneseq
  %v935 = vshrl.u32 %v934, 7
  %v936 = vsub.s32 0, %v935
  %v937 = vrot.slane %v932, %v936
  %938 = vrot.lane.b32.xlu0 %v937, 30
  %v939 = vpop.permute.xlu0 %938
  %v941 = vmul.f32 %v931, %v939
  %943 = vrot.lane.b32.xlu0 %v941, 98
  %v944 = vpop.permute.xlu0 %943
  %v946 = vsel %vm114, %v944, 0.0
  %947 = vadd.xlane.f32.xlu0 %v946
  %v948 = vpop.xlane.xlu0 %947
  %v949 = vld [vmem:[#allocation3] sm:$0x1]
  %v951 = vlaneseq
  %v952 = vshrl.u32 %v951, 7
  %v953 = vsub.s32 0, %v952
  %v954 = vrot.slane %v949, %v953
  %v956 = vadd.f32 %v948, %v954
  %vm957 = vcmask 7168
  %958 = vst.msk [vmem:[%s6] sm:$0xff] %vm957, %v956
  // Predicated region
  $region26: #{yahoo_lstm_forward.1} parent=0 // pred_check
    _
  $region27: #{yahoo_lstm_forward.1} parent=0 // pred_check_branch
    %960 = sbr.rel (0) target = $region29
  $region28: #{yahoo_lstm_forward.1} parent=0 // pred_region
    _
  $region29: #{yahoo_lstm_forward.1} parent=0 // pred_fallthru
    _
  // Predicated region
  $region30: #{yahoo_lstm_forward.1} parent=0 // pred_check
    _
  $region31: #{yahoo_lstm_forward.1} parent=0 // pred_check_branch
    %962 = sbr.rel (0) target = $region33
  $region32: #{yahoo_lstm_forward.1} parent=0 // pred_region
    _
  $region33: #{yahoo_lstm_forward.1} parent=0 // pred_fallthru
    _

</llo_original>
